<compile_context>
chip_gen: v7x
topology: tpu7x:2x2x1
jax: 0.10.0
libtpu: 0.0.40
codegen_flags: <defaults>
</compile_context>

<pallas_src>
import functools

import jax
import jax.numpy as jnp
from jax.experimental import pallas as pl
from jax.experimental.pallas import tpu as pltpu

_MIB = 1024 * 1024


def _cdiv(a: int, b: int) -> int:
    return -(-a // b)


def _physical_vmem_bytes() -> int:
    """Best-effort query of per-core VMEM; conservative default if unavailable."""
    try:
        return int(pltpu.get_tpu_info().vmem_capacity_bytes)
    except Exception:
        return 64 * _MIB  # v7x per-TensorCore VMEM; safe lower bound everywhere


def _select_tiling(n: int, c: int, x_itemsize: int, t_itemsize: int,
                   tile_budget_bytes: int):
    """Pick (row tile, num tiles, class chunk) for the streaming kernel."""
    sublane = max(8, 32 // min(x_itemsize, t_itemsize))

    # Class-chunk size: decouple the f32 temporaries from C for huge vocabs.
    chunk = c
    if c > 8192:
        for ck in (2048, 1024, 512):
            if c % ck == 0:
                chunk = ck
                break
    # TODO(synk): for extreme C with no clean chunk divisor (or where even a
    # sublane-tall (tm, C) input block overflows VMEM), add a second grid axis
    # over class chunks with cross-step online-LSE accumulators.

    # VMEM accounting, derated for v7x's 64 MiB parts: double-buffered x & t
    # input blocks at native dtype plus ~6 f32 (tm, chunk) temporaries that
    # Mosaic may materialize (x_f32, x-m, exp, t_f32, t*x, ...).
    per_row_bytes = c * 2 * (x_itemsize + t_itemsize) + chunk * 6 * 4
    tm_vmem = max(sublane,
                  (tile_budget_bytes // per_row_bytes) // sublane * sublane)
    tm_vmem = min(tm_vmem, 1024)  # diminishing returns past ~1k rows

    # Number of tiles: enough to respect the VMEM budget, and >= 2 whenever the
    # batch has >= 2 sublane groups so the "parallel" grid axis can shard the
    # batch across both v7x TensorCores; split the batch evenly across tiles.
    n_sub = _cdiv(n, sublane)
    min_tiles = 2 if n_sub >= 2 else 1
    num_tiles = max(min_tiles, _cdiv(n_sub * sublane, tm_vmem))
    tm = _cdiv(n_sub, num_tiles) * sublane          # <= tm_vmem by construction
    num_tiles = _cdiv(n, tm)                        # defensive; no empty tiles
    return tm, num_tiles, chunk


def _soft_ce_kernel(x_ref, t_ref, out_ref, *, n_rows: int, tm: int,
                    chunk: int, normalized_targets: bool):
    """One grid step: per-tile partial sum of soft-CE row losses.

    Writes a (1, 8, 128) f32 block filled with the tile's partial sum
    (padding rows of the remainder tile are masked to 0).  No cross-tile
    state -> the grid axis is safely 'parallel'.
    """
    i = pl.program_id(0)
    c = x_ref.shape[-1]
    num_chunks = c // chunk

    def update(carry, xj_raw, tj_raw):
        m, s, ts, txs = carry
        xj = xj_raw.astype(jnp.float32)
        m_new = jnp.maximum(m, jnp.max(xj, axis=-1, keepdims=True))
        s = s * jnp.exp(m - m_new) + jnp.sum(jnp.exp(xj - m_new), axis=-1,
                                             keepdims=True)
        if not normalized_targets:
            # Accumulate sum(t) in f32 without materializing a full upcast tile.
            ts = ts + jnp.sum(tj_raw, axis=-1, keepdims=True, dtype=jnp.float32)
        # t promotes to f32 in the product (f32 result on all generations).
        txs = txs + jnp.sum(tj_raw * xj, axis=-1, keepdims=True)
        return m_new, s, ts, txs

    init = (jnp.full((tm, 1), -jnp.inf, dtype=jnp.float32),   # running max
            jnp.zeros((tm, 1), jnp.float32),                  # running sum exp
            jnp.zeros((tm, 1), jnp.float32),                  # running sum t
            jnp.zeros((tm, 1), jnp.float32))                  # running sum t*x

    if num_chunks == 1:
        m, s, ts, txs = update(init, x_ref[...], t_ref[...])
    else:
        def body(j, carry):
            off = pl.multiple_of(j * chunk, chunk)
            return update(carry,
                          x_ref[:, pl.ds(off, chunk)],
                          t_ref[:, pl.ds(off, chunk)])
        m, s, ts, txs = jax.lax.fori_loop(0, num_chunks, body, init,
                                          unroll=num_chunks <= 8)

    lse = m + jnp.log(s)                                       # (tm, 1)
    if normalized_targets:
        row_loss = lse - txs                                   # sum(t) == 1
    else:
        row_loss = lse * ts - txs                              # (tm, 1)

    def write(rl):
        # Lane/sublane-aligned broadcast of the tile's scalar partial sum
        # -> unmasked vst, negligible writeback traffic.
        out_ref[...] = jnp.broadcast_to(jnp.sum(rl, keepdims=True),
                                        out_ref.shape)

    rem = n_rows % tm
    if rem == 0:
        write(row_loss)
    else:
        last = pl.num_programs(0) - 1

        @pl.when(i != last)
        def _():
            write(row_loss)

        @pl.when(i == last)
        def _():
            # Only the remainder tile has padding rows; mask them to 0 before
            # the tile reduction (select keeps any pad-row NaN/Inf out).
            local = jax.lax.broadcasted_iota(jnp.int32, (tm, 1), 0)
            write(jnp.where(local < rem, row_loss, 0.0))


def soft_target_cross_entropy(x: jax.Array, target: jax.Array, *,
                              targets_sum_to_one: bool = False) -> jax.Array:
    """Pallas TPU implementation of timm's SoftTargetCrossEntropy.forward."""
    assert x.shape == target.shape and x.ndim >= 2
    c = x.shape[-1]
    x2 = x.reshape(-1, c)
    t2 = target.reshape(-1, c)
    n = x2.shape[0]

    x_item = jnp.dtype(x2.dtype).itemsize
    t_item = jnp.dtype(t2.dtype).itemsize

    phys_vmem = _physical_vmem_bytes()
    # Working-set budget per grid step and the scoped VMEM limit for Mosaic.
    # On 64 MiB (v7x): ~21 MiB budget / 48 MiB limit; on 128 MiB (v5e/v6e):
    # 40 MiB budget / 96 MiB limit (v5e's default scoped limit is only 16 MiB,
    # so the explicit limit matters there).
    tile_budget = min(phys_vmem // 3, 40 * _MIB)
    vmem_limit = min((phys_vmem * 3) // 4, 96 * _MIB)

    tm, num_tiles, chunk = _select_tiling(n, c, x_item, t_item, tile_budget)

    cost = pl.CostEstimate(
        flops=6 * n * c,
        transcendentals=n * c + n,                 # exp per element + log per row
        bytes_accessed=n * c * (x_item + t_item) + num_tiles * 8 * 128 * 4,
    )

    partials = pl.pallas_call(
        functools.partial(_soft_ce_kernel, n_rows=n, tm=tm, chunk=chunk,
                          normalized_targets=targets_sum_to_one),
        out_shape=jax.ShapeDtypeStruct((num_tiles, 8, 128), jnp.float32),
        grid_spec=pltpu.PrefetchScalarGridSpec(
            num_scalar_prefetch=0,
            grid=(num_tiles,),
            in_specs=[
                pl.BlockSpec((tm, c), lambda i: (i, 0)),
                pl.BlockSpec((tm, c), lambda i: (i, 0)),
            ],
            out_specs=pl.BlockSpec((1, 8, 128), lambda i: (i, 0, 0)),
        ),
        compiler_params=pltpu.CompilerParams(
            dimension_semantics=("parallel",),   # no cross-tile state -> megacore OK
            vmem_limit_bytes=int(vmem_limit),
        ),
        cost_estimate=cost,
    )(x2, t2)

    # Every element of a tile's (8, 128) block holds the same partial sum;
    # take one element per tile, sum the tiny vector, divide by the true batch.
    return jnp.sum(partials[:, 0, 0]) / jnp.float32(n)


def _reference(x, target):
    logp = jax.nn.log_softmax(x.astype(jnp.float32), axis=-1)
    return jnp.mean(jnp.sum(-target.astype(jnp.float32) * logp, axis=-1))


if __name__ == "__main__":
    key = jax.random.PRNGKey(0)
    k1, k2 = jax.random.split(key)

    N, C = 8, 32  # small batch of logits over C classes
    x = jax.random.normal(k1, (N, C), dtype=jnp.float32)
    # Soft targets: a valid probability distribution per row.
    target = jax.nn.softmax(jax.random.normal(k2, (N, C), dtype=jnp.float32), axis=-1)

    loss = soft_target_cross_entropy(x, target)
    loss = jax.block_until_ready(loss)

    ref = _reference(x, target)
    assert jnp.allclose(loss, ref, rtol=1e-5, atol=1e-5), (loss, ref)

    print("KERNEL_OK")
</pallas_src>

<mosaic_0001>
module attributes {stable_mosaic.version = 11 : i64} {
  func.func @_soft_ce_kernel(%arg0: i32, %arg1: memref<8x32xf32, #tpu.memory_space<vmem>>, %arg2: memref<8x32xf32, #tpu.memory_space<vmem>>, %arg3: memref<1x8x128xf32, #tpu.memory_space<vmem>>) attributes {dimension_semantics = [#tpu.dimension_semantics<parallel>], iteration_bounds = array<i64: 1>, scalar_prefetch = 0 : i64, scratch_operands = 0 : i64, tpu.core_type = #tpu.core_type<tc>, window_params = [{transform_indices = @transform_0, window_bounds = array<i64: 8, 32>}, {transform_indices = @transform_1, window_bounds = array<i64: 8, 32>}, {transform_indices = @transform_2, window_bounds = array<i64: 1, 8, 128>}]} {
    %cst = arith.constant 0xFF800000 : f32
    %0 = vector.broadcast %cst : f32 to vector<8x1xf32>
    %cst_0 = arith.constant 0.000000e+00 : f32
    %1 = vector.broadcast %cst_0 : f32 to vector<8x1xf32>
    %cst_1 = arith.constant 0.000000e+00 : f32
    %2 = vector.broadcast %cst_1 : f32 to vector<8x1xf32>
    %cst_2 = arith.constant 0.000000e+00 : f32
    %3 = vector.broadcast %cst_2 : f32 to vector<8x1xf32>
    %c0 = arith.constant 0 : index
    %c0_3 = arith.constant 0 : index
    %4 = vector.load %arg1[%c0, %c0_3] : memref<8x32xf32, #tpu.memory_space<vmem>>, vector<8x32xf32>
    %c0_4 = arith.constant 0 : index
    %c0_5 = arith.constant 0 : index
    %5 = vector.load %arg2[%c0_4, %c0_5] : memref<8x32xf32, #tpu.memory_space<vmem>>, vector<8x32xf32>
    %cst_6 = arith.constant dense<0xFF800000> : vector<8xf32>
    %6 = vector.multi_reduction <maximumf>, %4, %cst_6 [1] : vector<8x32xf32> to vector<8xf32>
    %7 = vector.shape_cast %6 : vector<8xf32> to vector<8x1xf32>
    %8 = arith.maximumf %0, %7 : vector<8x1xf32>
    %9 = arith.subf %0, %8 : vector<8x1xf32>
    %10 = math.exp %9 : vector<8x1xf32>
    %11 = arith.mulf %1, %10 : vector<8x1xf32>
    %12 = vector.broadcast %8 : vector<8x1xf32> to vector<8x32xf32>
    %13 = arith.subf %4, %12 : vector<8x32xf32>
    %14 = math.exp %13 : vector<8x32xf32>
    %cst_7 = arith.constant dense<0.000000e+00> : vector<8xf32>
    %15 = vector.multi_reduction <add>, %14, %cst_7 [1] : vector<8x32xf32> to vector<8xf32>
    %16 = vector.shape_cast %15 : vector<8xf32> to vector<8x1xf32>
    %17 = arith.addf %11, %16 : vector<8x1xf32>
    %cst_8 = arith.constant dense<0.000000e+00> : vector<8xf32>
    %18 = vector.multi_reduction <add>, %5, %cst_8 [1] : vector<8x32xf32> to vector<8xf32>
    %19 = vector.shape_cast %18 : vector<8xf32> to vector<8x1xf32>
    %20 = arith.addf %2, %19 : vector<8x1xf32>
    %21 = arith.mulf %5, %4 : vector<8x32xf32>
    %cst_9 = arith.constant dense<0.000000e+00> : vector<8xf32>
    %22 = vector.multi_reduction <add>, %21, %cst_9 [1] : vector<8x32xf32> to vector<8xf32>
    %23 = vector.shape_cast %22 : vector<8xf32> to vector<8x1xf32>
    %24 = arith.addf %3, %23 : vector<8x1xf32>
    %25 = math.log %17 : vector<8x1xf32>
    %26 = arith.addf %8, %25 : vector<8x1xf32>
    %27 = arith.mulf %26, %20 : vector<8x1xf32>
    %28 = arith.subf %27, %24 : vector<8x1xf32>
    %29 = vector.shape_cast %28 : vector<8x1xf32> to vector<1x8x1xf32>
    %cst_10 = arith.constant dense<0.000000e+00> : vector<1xf32>
    %30 = vector.multi_reduction <add>, %29, %cst_10 [1, 2] : vector<1x8x1xf32> to vector<1xf32>
    %31 = vector.shape_cast %30 : vector<1xf32> to vector<1x1x1xf32>
    %32 = vector.extract %31[0, 0, 0] : f32 from vector<1x1x1xf32>
    %33 = vector.broadcast %32 : f32 to vector<1x1xf32>
    %34 = vector.shape_cast %33 : vector<1x1xf32> to vector<1x1x1xf32>
    %35 = vector.broadcast %34 : vector<1x1x1xf32> to vector<1x8x128xf32>
    %c0_11 = arith.constant 0 : index
    %c0_12 = arith.constant 0 : index
    %c0_13 = arith.constant 0 : index
    %36 = vector.load %arg3[%c0_11, %c0_12, %c0_13] : memref<1x8x128xf32, #tpu.memory_space<vmem>>, vector<1x8x128xf32>
    tpu.vector_store %arg3[%c0_11, %c0_12, %c0_13], %35 {strides = array<i32>} : memref<1x8x128xf32, #tpu.memory_space<vmem>>, vector<1x8x128xf32>,
    return
  }
  func.func @transform_0(%arg0: i32) -> (i32, i32) {
    %c0_i32 = arith.constant 0 : i32
    %c0_i32_0 = arith.constant 0 : i32
    return %arg0, %c0_i32 : i32, i32
  }
  func.func @transform_1(%arg0: i32) -> (i32, i32) {
    %c0_i32 = arith.constant 0 : i32
    %c0_i32_0 = arith.constant 0 : i32
    return %arg0, %c0_i32 : i32, i32
  }
  func.func @transform_2(%arg0: i32) -> (i32, i32, i32) {
    %c0_i32 = arith.constant 0 : i32
    %c0_i32_0 = arith.constant 0 : i32
    %c0_i32_1 = arith.constant 0 : i32
    return %arg0, %c0_i32, %c0_i32_0 : i32, i32, i32
  }
}

</mosaic_0001>

<llo_original>
// kernel: tpu_custom_call.1
$region0: #{tpu_custom_call.1}
  #allocation0 [shape = 'u32[]', space=smem, size = 0x4, offset = 0x4, fixed_abs, tag = 'smem constant byte address 0x4 - core index']
  #allocation1 [shape = 'u32[144,128]{1,0:T(1,128)}', space=vmem, size = 0x12000, scoped, tag = 'internal scratch']
  %s0 = inlined_call_operand.hbm [shape: f32[8,32], index: 0, kind: input, shape index: {}]
  %s1 = inlined_call_operand.hbm [shape: f32[8,32], index: 1, kind: input, shape index: {}]
  %s2 = inlined_call_operand.hbm [shape: f32[1,8,128], index: 2, kind: output, shape index: {}]
  %s3 = sld [smem:[#allocation0]]
  $region26: #{tpu_custom_call.1} parent=0
    _
  %s5 = ssub.s32 1, %s3
  %s6 = scalar_select 0, %s5, %s3
  $region1: #{tpu_custom_call.1} parent=0
    #allocation2 [shape = 'u8[4096]{0}', space=vmem, size = 0x1000, scoped, tag = 'input window, operand 0, single buffered']
    #allocation3 [shape = 's32[1]{0}', space=sflag, size = 0x4, scoped, tag = 'scoped memory for tpu_custom_call.1']
    #allocation4 [shape = 's32[1]{0}', space=sflag, size = 0x4, scoped, tag = 'scoped memory for tpu_custom_call.1']
    #allocation5 [shape = 'u8[4096]{0}', space=vmem, size = 0x1000, scoped, tag = 'input window, operand 1, single buffered']
    #allocation6 [shape = 's32[1]{0}', space=sflag, size = 0x4, scoped, tag = 'scoped memory for tpu_custom_call.1']
    #allocation7 [shape = 'u8[4096]{0}', space=vmem, size = 0x1000, scoped, tag = 'output window, operand 0, single buffered']
    %7 = vsyncpa [#allocation3], 0
    %8 = vsyncpa [#allocation6], 0
    %9 = vsyncpa [#allocation4], 0
    // Predicated region
    $region2: #{tpu_custom_call.1} parent=1 // pred_check
      _
    $region3: #{tpu_custom_call.1} parent=1 // pred_check_branch
      %11 = sbr.rel (0) target = $region5
    $region4: #{tpu_custom_call.1} parent=1 // pred_region
      %s13 = ssub.s32 128, 128
      %14 = vsyncadd [#allocation3], %s13
      %s16 = sshll.u32 [#allocation2], 4
      %s17 = int_to_ptr.vmem [resolvable:$true] %s16
      %19 = dma.hbm_to_vmem [thread:$0]  %s0, 128, %s17, [#allocation3]
    $region5: #{tpu_custom_call.1} parent=1 // pred_fallthru
      _
    // Predicated region
    $region6: #{tpu_custom_call.1} parent=1 // pred_check
      _
    $region7: #{tpu_custom_call.1} parent=1 // pred_check_branch
      %21 = sbr.rel (0) target = $region9
    $region8: #{tpu_custom_call.1} parent=1 // pred_region
      %s23 = ssub.s32 128, 128
      %24 = vsyncadd [#allocation6], %s23
      %s26 = sshll.u32 [#allocation5], 4
      %s27 = int_to_ptr.vmem [resolvable:$true] %s26
      %29 = dma.hbm_to_vmem [thread:$0]  %s1, 128, %s27, [#allocation6]
    $region9: #{tpu_custom_call.1} parent=1 // pred_fallthru
      _
    // Predicated region
    $region10: #{tpu_custom_call.1} parent=1 // pred_check
      _
    $region11: #{tpu_custom_call.1} parent=1 // pred_check_branch
      %31 = sbr.rel (0) target = $region13
    $region12: #{tpu_custom_call.1} parent=1 // pred_region
      %32 = dma.done [#allocation3], 128
    $region13: #{tpu_custom_call.1} parent=1 // pred_fallthru
      _
    // Predicated region
    $region14: #{tpu_custom_call.1} parent=1 // pred_check
      _
    $region15: #{tpu_custom_call.1} parent=1 // pred_check_branch
      %34 = sbr.rel (0) target = $region17
    $region16: #{tpu_custom_call.1} parent=1 // pred_region
      %35 = dma.done [#allocation6], 128
    $region17: #{tpu_custom_call.1} parent=1 // pred_fallthru
      _
    %v36 = vld [vmem:[#allocation2] sm:$0xff]
    %v37 = vld [vmem:[#allocation5] sm:$0xff]
    %vm38 = vcmask 261120
    %v39 = vsel %vm38, %v36, -inf
    %40 = vmax.xlane.f32.xlu0 %v39
    %v41 = vpop.xlane.xlu0 %40
    %v42 = vsub.f32 -inf, %v41
    %v43 = vmul.f32 %v42, 1.442695
    %v44 = vpow.pop %v43
    %v45 = vmul.f32 %v44, 0.0
    %v46 = vsub.f32 %v36, %v41
    %v47 = vmul.f32 %v46, 1.442695
    %v48 = vpow.pop %v47
    %v49 = vsel %vm38, %v48, 0.0
    %50 = vadd.xlane.f32.xlu0 %v49
    %v51 = vpop.xlane.xlu0 %50
    %v52 = vadd.f32 %v45, %v51
    %v53 = vsel %vm38, %v37, 0.0
    %54 = vadd.xlane.f32.xlu0 %v53
    %v55 = vpop.xlane.xlu0 %54
    %v56 = vadd.f32 %v55, 0.0
    %v57 = vmul.f32 %v37, %v36
    %v58 = vsel %vm38, %v57, 0.0
    %59 = vadd.xlane.f32.xlu0 %v58
    %v60 = vpop.xlane.xlu0 %59
    %v61 = vadd.f32 %v60, 0.0
    %v62 = vlog2.pop %v52
    %v63 = vmul.f32 %v62, 0.6931472
    %v64 = vadd.f32 %v41, %v63
    %v65 = vmul.f32 %v64, %v56
    %v66 = vsub.f32 %v65, %v61
    %vm67 = vcmask 7168
    %v68 = vsel %vm67, %v66, 0.0
    %69 = vadd.xlane.f32.xlu0 %v68
    %v70 = vpop.xlane.xlu0 %69
    %v71 = vrot.slane %v70, 4
    %v72 = vadd.f32 %v70, %v71
    %v73 = vrot.slane %v72, 2
    %v74 = vadd.f32 %v72, %v73
    %v75 = vrot.slane %v74, 1
    %v76 = vadd.f32 %v74, %v75
    %s77 = vtos %v76
    %v78 = vstv %s77
    %79 = vst [vmem:[#allocation7] sm:$0xff] %v78
    // Predicated region
    $region18: #{tpu_custom_call.1} parent=1 // pred_check
      _
    $region19: #{tpu_custom_call.1} parent=1 // pred_check_branch
      %81 = sbr.rel (0) target = $region21
    $region20: #{tpu_custom_call.1} parent=1 // pred_region
      %s83 = ssub.s32 128, 128
      %84 = vsyncadd [#allocation4], %s83
      %s86 = sshll.u32 [#allocation7], 4
      %s87 = int_to_ptr.vmem [resolvable:$true] %s86
      %89 = dma.vmem_to_hbm [thread:$0]  %s87, 128, %s2, [#allocation4]
    $region21: #{tpu_custom_call.1} parent=1 // pred_fallthru
      _
    // Predicated region
    $region22: #{tpu_custom_call.1} parent=1 // pred_check
      _
    $region23: #{tpu_custom_call.1} parent=1 // pred_check_branch
      %91 = sbr.rel (0) target = $region25
    $region24: #{tpu_custom_call.1} parent=1 // pred_region
      %92 = dma.done [#allocation4], 128
    $region25: #{tpu_custom_call.1} parent=1 // pred_fallthru
      _
    %93 = vsyncpa [#allocation3], 1
    %94 = vsyncpa [#allocation6], 1
    %95 = vsyncpa [#allocation4], 1

</llo_original>
